<compile_context>
chip_gen: v6e
topology: v6e:2x2x1
jax: 0.10.0
libtpu: 0.0.40
codegen_flags: <defaults>
</compile_context>

<pallas_src>
import math

import jax
import jax.numpy as jnp
from jax.experimental import pallas as pl
from jax.experimental.pallas import tpu as pltpu

D_IN, D1, D2, D3 = 96, 72, 12, 3
D_OUT = D1 + D2 + D3   # 87
K_PAD = 128            # padded contraction dim: 96 features + 1 bias lane + 31 zero
N_PAD = 128            # lane-dense padded output width (one full vreg lane extent)


def _fused_mlp_kernel(x_ref, w_ref, out_ref):
    # Whole problem fits in VMEM; single grid point, no pipelining.
    # Single MXU pass: bias is row 96 of W, picked up by the constant-1 lane of x.
    out_ref[...] = jnp.dot(
        x_ref[...], w_ref[...], preferred_element_type=jnp.float32
    )


def pack_params(w1, b1, w2, b2, w3, b3):
    """One-time setup: precompose the cascade and fold biases into a (128,128) weight.

    cat([h1, h2, h3], 1) == [x | 1] @ [[ W1 | W1@W2 | W1@W2@W3 ]
                                       [ b1 | b1@W2+b2 | (b1@W2+b2)@W3+b3 ]]
    Run once per parameter set (cache the result); NOT part of the per-call path.
    """
    w12 = w1 @ w2                      # (96, 12)
    w123 = w12 @ w3                    # (96, 3)
    b2c = b1 @ w2 + b2                 # (1, 12)
    b3c = b2c @ w3 + b3                # (1, 3)
    w_cat = jnp.concatenate([w1, w12, w123], axis=1)   # (96, 87)
    b_cat = jnp.concatenate([b1, b2c, b3c], axis=1)    # (1, 87)

    w_pad = jnp.zeros((K_PAD, N_PAD), jnp.float32)
    w_pad = w_pad.at[:D_IN, :D_OUT].set(w_cat)
    w_pad = w_pad.at[D_IN, :D_OUT].set(b_cat[0])       # bias row at K index 96
    return w_pad


@jax.jit
def mlp_cat(x, w_pad):
    batch = x.shape[0]
    # Lane-dense padded activation: [x | 1 | 0 ... 0]; the constant-1 lane at
    # column 96 multiplies the bias row of w_pad for every batch row.
    x_pad = jnp.zeros((batch, K_PAD), jnp.float32)
    x_pad = x_pad.at[:, :D_IN].set(x)
    x_pad = x_pad.at[:, D_IN].set(1.0)

    vmem = pl.BlockSpec(memory_space=pltpu.MemorySpace.VMEM)
    out_padded = pl.pallas_call(
        _fused_mlp_kernel,
        out_shape=jax.ShapeDtypeStruct((batch, N_PAD), jnp.float32),
        in_specs=[vmem, vmem],
        out_specs=vmem,
    )(x_pad, w_pad)
    # Slice fuses inside this jit; downstream consumers could equally read lanes 0..86
    # of the padded result directly.
    return out_padded[:, :D_OUT]


def _linear_params(key, fan_in, fan_out):
    # Deterministic init mimicking torch.nn.Linear: U(-1/sqrt(fan_in), +1/sqrt(fan_in)).
    kw, kb = jax.random.split(key)
    bound = 1.0 / math.sqrt(fan_in)
    w = jax.random.uniform(kw, (fan_in, fan_out), jnp.float32, -bound, bound)
    b = jax.random.uniform(kb, (1, fan_out), jnp.float32, -bound, bound)
    return w, b


def reference(x, w1, b1, w2, b2, w3, b3):
    # Un-composed cascade: catches any error introduced by the weight precomposition
    # and the bias-folding trick.
    h1 = x @ w1 + b1
    h2 = h1 @ w2 + b2
    h3 = h2 @ w3 + b3
    return jnp.concatenate([h1, h2, h3], axis=1)


if __name__ == "__main__":
    key = jax.random.PRNGKey(0)
    kx, k1, k2, k3 = jax.random.split(key, 4)

    x1 = jax.random.normal(kx, (1, D_IN), jnp.float32)
    w1, b1 = _linear_params(k1, D_IN, D1)
    w2, b2 = _linear_params(k2, D1, D2)
    w3, b3 = _linear_params(k3, D2, D3)

    # One-time packing (hoisted out of the per-call path).
    w_pad = jax.block_until_ready(pack_params(w1, b1, w2, b2, w3, b3))

    out = mlp_cat(x1, w_pad)
    out = jax.block_until_ready(out)

    ref = reference(x1, w1, b1, w2, b2, w3, b3)
    assert out.shape == (1, D_OUT), out.shape
    assert jnp.allclose(out, ref, atol=1e-5, rtol=1e-5), "mismatch vs reference"

    print("KERNEL_OK")
</pallas_src>

<mosaic_0001>
module attributes {stable_mosaic.version = 11 : i64} {
  func.func @_fused_mlp_kernel(%arg0: memref<1x128xf32, #tpu.memory_space<vmem>>, %arg1: memref<128x128xf32, #tpu.memory_space<vmem>>, %arg2: memref<1x128xf32, #tpu.memory_space<vmem>>) attributes {dimension_semantics = [], scalar_prefetch = 0 : i64, scratch_operands = 0 : i64, tpu.core_type = #tpu.core_type<tc>} {
    %c0 = arith.constant 0 : index
    %c0_0 = arith.constant 0 : index
    %0 = vector.load %arg0[%c0, %c0_0] : memref<1x128xf32, #tpu.memory_space<vmem>>, vector<1x128xf32>
    %c0_1 = arith.constant 0 : index
    %c0_2 = arith.constant 0 : index
    %1 = vector.load %arg1[%c0_1, %c0_2] : memref<128x128xf32, #tpu.memory_space<vmem>>, vector<128x128xf32>
    %cst = arith.constant dense<0.000000e+00> : vector<1x128xf32>
    %2 = tpu.matmul %0, %1, %cst {dimension_numbers = #tpu.dot_dimension_numbers<[1], [0], [0], [1], [0, 0, 1, 1], [], []>} : vector<1x128xf32>, vector<128x128xf32>, vector<1x128xf32> -> vector<1x128xf32>
    %c0_3 = arith.constant 0 : index
    %c0_4 = arith.constant 0 : index
    %3 = vector.load %arg2[%c0_3, %c0_4] : memref<1x128xf32, #tpu.memory_space<vmem>>, vector<1x128xf32>
    tpu.vector_store %arg2[%c0_3, %c0_4], %2 {strides = array<i32>} : memref<1x128xf32, #tpu.memory_space<vmem>>, vector<1x128xf32>,
    return
  }
}

</mosaic_0001>

<llo_original>
// kernel: mlp_cat.1
$region0: #{mlp_cat.1}
  #allocation0 [shape = 'u32[]', space=smem, size = 0x4, offset = 0x4, fixed_abs, tag = 'smem constant byte address 0x4 - core index']
  #allocation1 [shape = 'u32[144,128]{1,0:T(1,128)}', space=vmem, size = 0x12000, scoped, tag = 'internal scratch']
  %s0 = inlined_call_operand.vmem [shape: f32[1,128], index: 0, kind: input, shape index: {}]
  %s1 = inlined_call_operand.hbm [shape: f32[128,128], index: 1, kind: input, shape index: {}]
  %s2 = inlined_call_operand.hbm [shape: f32[1,128], index: 2, kind: output, shape index: {}]
  %s3 = sld [smem:[#allocation0]]
  $region22: #{mlp_cat.1} parent=0
    _
  %s5 = ssub.s32 1, %s3
  %s6 = scalar_select 0, %s5, %s3
  $region1: #{mlp_cat.1} parent=0
    #allocation2 [shape = 'u8[65536]{0}', space=vmem, size = 0x10000, scoped, tag = 'input window, operand 1, single buffered']
    #allocation3 [shape = 's32[1]{0}', space=sflag, size = 0x4, scoped, tag = 'scoped memory for mlp_cat.1']
    #allocation4 [shape = 's32[1]{0}', space=sflag, size = 0x4, scoped, tag = 'scoped memory for mlp_cat.1']
    #allocation5 [shape = 'u8[512]{0}', space=vmem, size = 0x400, scoped, tag = 'output window, operand 0, single buffered']
    %7 = vsyncpa [#allocation3], 0
    %8 = vsyncpa [#allocation4], 0
    // Predicated region
    $region2: #{mlp_cat.1} parent=1 // pred_check
      _
    $region3: #{mlp_cat.1} parent=1 // pred_check_branch
      %10 = sbr.rel (0) target = $region5
    $region4: #{mlp_cat.1} parent=1 // pred_region
      _
    $region5: #{mlp_cat.1} parent=1 // pred_fallthru
      _
    // Predicated region
    $region6: #{mlp_cat.1} parent=1 // pred_check
      _
    $region7: #{mlp_cat.1} parent=1 // pred_check_branch
      %12 = sbr.rel (0) target = $region9
    $region8: #{mlp_cat.1} parent=1 // pred_region
      %s14 = ssub.s32 2048, 2048
      %15 = vsyncadd [#allocation3], %s14
      %s16 = sshll.u32 [#allocation2], 4
      %s17 = int_to_ptr.vmem [resolvable:$true] %s16
      %22 = dma.hbm_to_vmem [thread:$0]  %s1, 2048, %s17, [#allocation3], 128, 128, 8
    $region9: #{mlp_cat.1} parent=1 // pred_fallthru
      _
    // Predicated region
    $region10: #{mlp_cat.1} parent=1 // pred_check
      _
    $region11: #{mlp_cat.1} parent=1 // pred_check_branch
      %24 = sbr.rel (0) target = $region13
    $region12: #{mlp_cat.1} parent=1 // pred_region
      %25 = dma.done [#allocation3], 2048
    $region13: #{mlp_cat.1} parent=1 // pred_fallthru
      _
    %v26 = vld [vmem:[%s0] sm:$0x1]
    %v27 = vld [vmem:[#allocation2] sm:$0xff]
    %v28 = vld [vmem:[#allocation2 + $0x8] sm:$0xff]
    %v29 = vld [vmem:[#allocation2 + $0x10] sm:$0xff]
    %v30 = vld [vmem:[#allocation2 + $0x18] sm:$0xff]
    %v31 = vld [vmem:[#allocation2 + $0x20] sm:$0xff]
    %v32 = vld [vmem:[#allocation2 + $0x28] sm:$0xff]
    %v33 = vld [vmem:[#allocation2 + $0x30] sm:$0xff]
    %v34 = vld [vmem:[#allocation2 + $0x38] sm:$0xff]
    %v35 = vld [vmem:[#allocation2 + $0x40] sm:$0xff]
    %v36 = vld [vmem:[#allocation2 + $0x48] sm:$0xff]
    %v37 = vld [vmem:[#allocation2 + $0x50] sm:$0xff]
    %v38 = vld [vmem:[#allocation2 + $0x58] sm:$0xff]
    %v39 = vld [vmem:[#allocation2 + $0x60] sm:$0xff]
    %v40 = vld [vmem:[#allocation2 + $0x68] sm:$0xff]
    %v41 = vld [vmem:[#allocation2 + $0x70] sm:$0xff]
    %v42 = vld [vmem:[#allocation2 + $0x78] sm:$0xff]
    %43 = vmatprep.subr.mxu0 0.0
    %44 = vmatpush1.msra.mxu0 %v42
    %45 = vmatprep.subr.mxu0 0.0
    %46 = vmatpush1.msra.mxu0 %v41
    %47 = vmatprep.subr.mxu0 0.0
    %48 = vmatpush1.msra.mxu0 %v40
    %49 = vmatprep.subr.mxu0 0.0
    %50 = vmatpush1.msra.mxu0 %v39
    %51 = vmatprep.subr.mxu0 0.0
    %52 = vmatpush1.msra.mxu0 %v38
    %53 = vmatprep.subr.mxu0 0.0
    %54 = vmatpush1.msra.mxu0 %v37
    %55 = vmatprep.subr.mxu0 0.0
    %56 = vmatpush1.msra.mxu0 %v36
    %57 = vmatprep.subr.mxu0 0.0
    %58 = vmatpush1.msra.mxu0 %v35
    %59 = vmatprep.subr.mxu0 0.0
    %60 = vmatpush1.msra.mxu0 %v34
    %61 = vmatprep.subr.mxu0 0.0
    %62 = vmatpush1.msra.mxu0 %v33
    %63 = vmatprep.subr.mxu0 0.0
    %64 = vmatpush1.msra.mxu0 %v32
    %65 = vmatprep.subr.mxu0 0.0
    %66 = vmatpush1.msra.mxu0 %v31
    %67 = vmatprep.subr.mxu0 0.0
    %68 = vmatpush1.msra.mxu0 %v30
    %69 = vmatprep.subr.mxu0 0.0
    %70 = vmatpush1.msra.mxu0 %v29
    %71 = vmatprep.subr.mxu0 0.0
    %72 = vmatpush1.msra.mxu0 %v28
    %73 = vmatprep.subr.mxu0 0.0
    %74 = vmatpush1.msra.mxu0 %v27
    %75 = vmatprep.subr.mxu0 0.0
    %76 = vmatpush2.msra.mxu0 0.0
    %77 = vmatprep.subr.mxu0 0.0
    %78 = vmatpush2.msra.mxu0 0.0
    %79 = vmatprep.subr.mxu0 0.0
    %80 = vmatpush2.msra.mxu0 0.0
    %81 = vmatprep.subr.mxu0 0.0
    %82 = vmatpush2.msra.mxu0 0.0
    %83 = vmatprep.subr.mxu0 0.0
    %84 = vmatpush2.msra.mxu0 0.0
    %85 = vmatprep.subr.mxu0 0.0
    %86 = vmatpush2.msra.mxu0 0.0
    %87 = vmatprep.subr.mxu0 0.0
    %88 = vmatpush2.msra.mxu0 0.0
    %89 = vmatprep.subr.mxu0 0.0
    %90 = vmatpush2.msra.mxu0 0.0
    %91 = vmatprep.subr.mxu0 0.0
    %92 = vmatpush2.msra.mxu0 0.0
    %93 = vmatprep.subr.mxu0 0.0
    %94 = vmatpush2.msra.mxu0 0.0
    %95 = vmatprep.subr.mxu0 0.0
    %96 = vmatpush2.msra.mxu0 0.0
    %97 = vmatprep.subr.mxu0 0.0
    %98 = vmatpush2.msra.mxu0 0.0
    %99 = vmatprep.subr.mxu0 0.0
    %100 = vmatpush2.msra.mxu0 0.0
    %101 = vmatprep.subr.mxu0 0.0
    %102 = vmatpush2.msra.mxu0 0.0
    %103 = vmatprep.subr.mxu0 0.0
    %104 = vmatpush2.msra.mxu0 0.0
    %105 = vmatprep.subr.mxu0 0.0
    %106 = vmatpush2.msra.mxu0 0.0
    %107 = vmatprep.mubr.f32.mxu0 0.0
    %108 = vmatmul.mubr.f32.gmra.mxu0 %v26
    %v109 = vpop.f32.mrf.mxu0
    %v110 = vadd.f32 0.0, %v109
    %v111 = vpop.f32.mrf.mxu0
    %112 = vdwg.mxu0
    %113 = vst [vmem:[#allocation5] sm:$0x1] %v110
    // Predicated region
    $region14: #{mlp_cat.1} parent=1 // pred_check
      _
    $region15: #{mlp_cat.1} parent=1 // pred_check_branch
      %115 = sbr.rel (0) target = $region17
    $region16: #{mlp_cat.1} parent=1 // pred_region
      %s117 = ssub.s32 16, 16
      %118 = vsyncadd [#allocation4], %s117
      %s120 = sshll.u32 [#allocation5], 4
      %s121 = int_to_ptr.vmem [resolvable:$true] %s120
      %123 = dma.vmem_to_hbm [thread:$0]  %s121, 16, %s2, [#allocation4]
    $region17: #{mlp_cat.1} parent=1 // pred_fallthru
      _
    // Predicated region
    $region18: #{mlp_cat.1} parent=1 // pred_check
      _
    $region19: #{mlp_cat.1} parent=1 // pred_check_branch
      %125 = sbr.rel (0) target = $region21
    $region20: #{mlp_cat.1} parent=1 // pred_region
      %126 = dma.done [#allocation4], 16
    $region21: #{mlp_cat.1} parent=1 // pred_fallthru
      _
    %127 = vsyncpa [#allocation3], 1
    %128 = vsyncpa [#allocation4], 1

</llo_original>
